<compile_context>
chip_gen: v6e
topology: v6e:2x2x1
jax: 0.10.0
libtpu: 0.0.40
codegen_flags: <defaults>
</compile_context>

<pallas_src>
import jax
import jax.numpy as jnp
from jax import lax
from jax.experimental import pallas as pl
from jax.experimental.pallas import tpu as pltpu

IGNORE_INDEX = -100
LANES = 128
TILE_ROWS_MAX = 2048       # (2048,128) f32 block = 1 MiB per stream per step
SUB_ROWS_MAX = 256         # in-tile strip size: keeps live vregs well under 64


def _round_up(v, m):
    return -(-v // m) * m


def _make_kernel(tile_rows, sub_rows, steps, blocks, rows, has_phantom,
                 ignore_index):
    """Build the kernel with all static config baked in via closure."""
    nsub = tile_rows // sub_rows
    ragged_rows = rows - (blocks - 1) * tile_rows     # valid rows in last block
    is_ragged = ragged_rows != tile_rows
    n_full = blocks - 1 if is_ragged else blocks      # blk < n_full => full block
    full_subs = ragged_rows // sub_rows               # full strips in last block
    rem_rows = ragged_rows - full_subs * sub_rows     # ragged rows in its last strip

    def kernel(x_ref, t_ref, sum_ref, cnt_ref):
        p = pl.program_id(0)       # "parallel" chunk axis (v7x megacore)
        s = pl.program_id(1)       # "arbitrary" reduction axis

        @pl.when(s == 0)
        def _():
            sum_ref[...] = jnp.zeros_like(sum_ref)
            cnt_ref[...] = jnp.zeros_like(cnt_ref)

        def strip(c, row_limit=None):
            """Accumulate one (sub_rows, LANES) strip of the current tile."""
            r0 = c * sub_rows
            if not isinstance(r0, int):
                r0 = pl.multiple_of(r0, sub_rows)
            t = t_ref[pl.ds(r0, sub_rows), :]          # native target dtype
            mask = t != ignore_index
            if row_limit is not None:                  # only the ragged strip
                rid = lax.broadcasted_iota(jnp.int32, (sub_rows, LANES), 0)
                mask = jnp.logical_and(mask, rid < row_limit)
            x = x_ref[pl.ds(r0, sub_rows), :].astype(jnp.float32)
            y = t.astype(jnp.float32)
            # Numerically stable BCE-with-logits (matches torch BCEWithLogitsLoss).
            loss = jnp.maximum(x, 0.0) - x * y + jnp.log1p(jnp.exp(-jnp.abs(x)))
            # NOTE: keep this as a where-SELECT (not `loss * maskf`); it is what
            # guarantees garbage reads in Pallas-padded edge tiles never poison
            # the accumulator with NaN/Inf.
            loss = jnp.where(mask, loss, 0.0)
            maskf = mask.astype(jnp.float32)
            # Fold to the resident (8, LANES) accumulators with pure VPU adds.
            g = sub_rows // 8
            sum_ref[...] += loss.reshape(g, 8, LANES).sum(axis=0)
            cnt_ref[...] += maskf.reshape(g, 8, LANES).sum(axis=0)

        def loop_strips(count):
            if count == 1:
                strip(0)
            elif count > 1:
                def body(c, carry):
                    strip(c)
                    return carry
                lax.fori_loop(0, count, body, 0)

        def full_tile():                 # fast path: no row mask at all
            loop_strips(nsub)

        def ragged_tile():               # last block: mask only its last strip
            loop_strips(full_subs)
            if rem_rows:
                strip(full_subs, row_limit=rem_rows)

        if not (is_ragged or has_phantom):
            full_tile()
        else:
            blk = p * steps + s

            @pl.when(blk < n_full)
            def _():
                full_tile()

            if is_ragged:
                @pl.when(blk == blocks - 1)
                def _():
                    ragged_tile()
            # blk == blocks (phantom tail step of the 2nd chunk): skipped.

    return kernel


def bce_with_logits_loss_with_mask(logits, targets, ignore_index=IGNORE_INDEX):
    """logits: float array; targets: int array ({0,1} or ignore_index)."""
    assert logits.shape == targets.shape
    x = logits.reshape(-1)              # native float dtype; upcast in-kernel
    t = targets.reshape(-1)             # native dtype; NO wrapper-side cast pass
    n = x.shape[0]
    if n == 0:
        return jnp.float32(jnp.nan)     # mean over an empty selection

    pad = (-n) % LANES
    if pad:
        # Only non-128-aligned sizes pay this copy; padding is ignore-masked.
        # TODO(synk): handle the unaligned tail fully in-kernel (scalar-prefetch
        # of n + flat-index mask) to avoid this extra HBM pass.
        x = jnp.concatenate([x, jnp.zeros((pad,), x.dtype)])
        t = jnp.concatenate([t, jnp.full((pad,), ignore_index, t.dtype)])
    rows = (n + pad) // LANES
    x2 = x.reshape(rows, LANES)
    t2 = t.reshape(rows, LANES)

    sub_rows = min(SUB_ROWS_MAX, _round_up(rows, 8))
    tile_rows = min(TILE_ROWS_MAX, _round_up(rows, sub_rows))
    blocks = pl.cdiv(rows, tile_rows)
    # Split the block range into 2 chunks whenever possible so both of v7x's
    # TensorCores get work; the "parallel" axis is measured-neutral on v5e/v6e.
    nchunks = 2 if blocks >= 2 else 1
    steps = pl.cdiv(blocks, nchunks)
    has_phantom = nchunks * steps > blocks

    kernel = _make_kernel(tile_rows, sub_rows, steps, blocks, rows,
                          has_phantom, ignore_index)

    if has_phantom:
        # Clamp so the phantom last step of chunk 1 DMAs a valid (skipped) block.
        in_map = lambda p, s: (jnp.minimum(p * steps + s, blocks - 1), 0)
    else:
        in_map = lambda p, s: (p * steps + s, 0)
    out_map = lambda p, s: (p, 0, 0)

    sums, cnts = pl.pallas_call(
        kernel,
        out_shape=(
            jax.ShapeDtypeStruct((nchunks, 8, LANES), jnp.float32),
            jax.ShapeDtypeStruct((nchunks, 8, LANES), jnp.float32),
        ),
        grid=(nchunks, steps),
        in_specs=[
            pl.BlockSpec((tile_rows, LANES), in_map),
            pl.BlockSpec((tile_rows, LANES), in_map),
        ],
        out_specs=(
            pl.BlockSpec((None, 8, LANES), out_map),
            pl.BlockSpec((None, 8, LANES), out_map),
        ),
        compiler_params=pltpu.CompilerParams(
            dimension_semantics=("parallel", "arbitrary"),
            vmem_limit_bytes=32 * 1024 * 1024,
        ),
    )(x2, t2)

    # Tiny final reduce + divide in XLA. (count == 0 -> NaN, like PyTorch's
    # mean over an empty masked_select.)
    return jnp.sum(sums) / jnp.sum(cnts)


def _reference(logits, targets, ignore_index=IGNORE_INDEX):
    x = logits.reshape(-1).astype(jnp.float32)
    t = targets.reshape(-1)
    mask = t != ignore_index
    y = t.astype(jnp.float32)
    loss = jnp.maximum(x, 0.0) - x * y + jnp.log1p(jnp.exp(-jnp.abs(x)))
    return jnp.sum(jnp.where(mask, loss, 0.0)) / jnp.sum(mask)


def _make_case(key, shape):
    k1, k2, k3 = jax.random.split(key, 3)
    logits = jax.random.normal(k1, shape, dtype=jnp.float32)
    targets = jax.random.bernoulli(k2, 0.5, shape).astype(jnp.int32)
    ignore = jax.random.bernoulli(k3, 0.25, shape)
    targets = jnp.where(ignore, IGNORE_INDEX, targets)
    return logits, targets


if __name__ == "__main__":
    root = jax.random.PRNGKey(0)
    keys = jax.random.split(root, 4)
    cases = [
        (2, 4, 16, 16),     # primary NCHW shape of the PyTorch module
        (2, 4, 160, 160),   # single large ragged block (in-tile strip loop)
        (2, 4, 272, 272),   # 3 blocks: 2 TC chunks + phantom step + ragged tail
        (2, 4, 15, 15),     # non-128-aligned element count (pad branch)
    ]
    for key, shape in zip(keys, cases):
        logits, targets = _make_case(key, shape)
        out = jax.block_until_ready(
            bce_with_logits_loss_with_mask(logits, targets))
        ref = _reference(logits, targets)
        assert jnp.allclose(out, ref, rtol=1e-5, atol=1e-5), (shape, out, ref)

    print("KERNEL_OK")
</pallas_src>

<mosaic_0001>
module attributes {stable_mosaic.version = 11 : i64} {
  func.func @kernel(%arg0: i32, %arg1: i32, %arg2: memref<16x128xf32, #tpu.memory_space<vmem>>, %arg3: memref<16x128xi32, #tpu.memory_space<vmem>>, %arg4: memref<1x8x128xf32, #tpu.memory_space<vmem>>, %arg5: memref<1x8x128xf32, #tpu.memory_space<vmem>>) attributes {dimension_semantics = [#tpu.dimension_semantics<parallel>, #tpu.dimension_semantics<arbitrary>], iteration_bounds = array<i64: 1, 1>, scalar_prefetch = 0 : i64, scratch_operands = 0 : i64, tpu.core_type = #tpu.core_type<tc>, window_params = [{transform_indices = @transform_0, window_bounds = array<i64: 16, 128>}, {transform_indices = @transform_1, window_bounds = array<i64: 16, 128>}, {transform_indices = @transform_2, window_bounds = array<i64: 1, 8, 128>}, {transform_indices = @transform_3, window_bounds = array<i64: 1, 8, 128>}]} {
    %c0_i32 = arith.constant 0 : i32
    %0 = arith.cmpi eq, %arg1, %c0_i32 : i32
    %1 = arith.extui %0 : i1 to i32
    %c0_i32_0 = arith.constant 0 : i32
    %2 = arith.cmpi ne, %1, %c0_i32_0 : i32
    scf.if %2 {
      %cst_20 = arith.constant 0.000000e+00 : f32
      %38 = vector.broadcast %cst_20 : f32 to vector<8x128xf32>
      %c0_21 = arith.constant 0 : index
      %c0_22 = arith.constant 0 : index
      %c0_23 = arith.constant 0 : index
      %39 = vector.load %arg4[%c0_21, %c0_22, %c0_23] : memref<1x8x128xf32, #tpu.memory_space<vmem>>, vector<1x8x128xf32>
      %40 = vector.shape_cast %39 : vector<1x8x128xf32> to vector<8x128xf32>
      %41 = vector.shape_cast %38 : vector<8x128xf32> to vector<1x8x128xf32>
      tpu.vector_store %arg4[%c0_21, %c0_22, %c0_23], %41 {strides = array<i32>} : memref<1x8x128xf32, #tpu.memory_space<vmem>>, vector<1x8x128xf32>,
      %cst_24 = arith.constant 0.000000e+00 : f32
      %42 = vector.broadcast %cst_24 : f32 to vector<8x128xf32>
      %c0_25 = arith.constant 0 : index
      %c0_26 = arith.constant 0 : index
      %c0_27 = arith.constant 0 : index
      %43 = vector.load %arg5[%c0_25, %c0_26, %c0_27] : memref<1x8x128xf32, #tpu.memory_space<vmem>>, vector<1x8x128xf32>
      %44 = vector.shape_cast %43 : vector<1x8x128xf32> to vector<8x128xf32>
      %45 = vector.shape_cast %42 : vector<8x128xf32> to vector<1x8x128xf32>
      tpu.vector_store %arg5[%c0_25, %c0_26, %c0_27], %45 {strides = array<i32>} : memref<1x8x128xf32, #tpu.memory_space<vmem>>, vector<1x8x128xf32>,
    } else {
    }
    %c0 = arith.constant 0 : index
    %c0_1 = arith.constant 0 : index
    %3 = vector.load %arg3[%c0, %c0_1] : memref<16x128xi32, #tpu.memory_space<vmem>>, vector<16x128xi32>
    %c-100_i32 = arith.constant -100 : i32
    %4 = vector.broadcast %c-100_i32 : i32 to vector<16x128xi32>
    %5 = arith.cmpi ne, %3, %4 : vector<16x128xi32>
    %c0_2 = arith.constant 0 : index
    %c0_3 = arith.constant 0 : index
    %6 = vector.load %arg2[%c0_2, %c0_3] : memref<16x128xf32, #tpu.memory_space<vmem>>, vector<16x128xf32>
    %7 = arith.sitofp %3 : vector<16x128xi32> to vector<16x128xf32>
    %cst = arith.constant 0.000000e+00 : f32
    %8 = vector.broadcast %cst : f32 to vector<16x128xf32>
    %9 = arith.maximumf %6, %8 : vector<16x128xf32>
    %10 = arith.mulf %6, %7 : vector<16x128xf32>
    %11 = arith.subf %9, %10 : vector<16x128xf32>
    %12 = math.absf %6 : vector<16x128xf32>
    %cst_4 = arith.constant 0.000000e+00 : f32
    %13 = vector.broadcast %cst_4 : f32 to vector<16x128xf32>
    %14 = arith.subf %13, %12 : vector<16x128xf32>
    %15 = math.exp %14 : vector<16x128xf32>
    %16 = math.log1p %15 : vector<16x128xf32>
    %17 = arith.addf %11, %16 : vector<16x128xf32>
    %cst_5 = arith.constant 0.000000e+00 : f32
    %18 = vector.broadcast %cst_5 : f32 to vector<16x128xf32>
    %19 = arith.select %5, %17, %18 : vector<16x128xi1>, vector<16x128xf32>
    %20 = arith.extui %5 : vector<16x128xi1> to vector<16x128xi32>
    %21 = arith.sitofp %20 : vector<16x128xi32> to vector<16x128xf32>
    %c0_6 = arith.constant 0 : index
    %c0_7 = arith.constant 0 : index
    %c0_8 = arith.constant 0 : index
    %22 = vector.load %arg4[%c0_6, %c0_7, %c0_8] : memref<1x8x128xf32, #tpu.memory_space<vmem>>, vector<1x8x128xf32>
    %23 = vector.shape_cast %22 : vector<1x8x128xf32> to vector<8x128xf32>
    %24 = vector.shape_cast %19 : vector<16x128xf32> to vector<2x8x128xf32>
    %cst_9 = arith.constant dense<0.000000e+00> : vector<8x128xf32>
    %25 = vector.multi_reduction <add>, %24, %cst_9 [0] : vector<2x8x128xf32> to vector<8x128xf32>
    %26 = arith.addf %23, %25 : vector<8x128xf32>
    %c0_10 = arith.constant 0 : index
    %c0_11 = arith.constant 0 : index
    %c0_12 = arith.constant 0 : index
    %27 = vector.load %arg4[%c0_10, %c0_11, %c0_12] : memref<1x8x128xf32, #tpu.memory_space<vmem>>, vector<1x8x128xf32>
    %28 = vector.shape_cast %27 : vector<1x8x128xf32> to vector<8x128xf32>
    %29 = vector.shape_cast %26 : vector<8x128xf32> to vector<1x8x128xf32>
    tpu.vector_store %arg4[%c0_10, %c0_11, %c0_12], %29 {strides = array<i32>} : memref<1x8x128xf32, #tpu.memory_space<vmem>>, vector<1x8x128xf32>,
    %c0_13 = arith.constant 0 : index
    %c0_14 = arith.constant 0 : index
    %c0_15 = arith.constant 0 : index
    %30 = vector.load %arg5[%c0_13, %c0_14, %c0_15] : memref<1x8x128xf32, #tpu.memory_space<vmem>>, vector<1x8x128xf32>
    %31 = vector.shape_cast %30 : vector<1x8x128xf32> to vector<8x128xf32>
    %32 = vector.shape_cast %21 : vector<16x128xf32> to vector<2x8x128xf32>
    %cst_16 = arith.constant dense<0.000000e+00> : vector<8x128xf32>
    %33 = vector.multi_reduction <add>, %32, %cst_16 [0] : vector<2x8x128xf32> to vector<8x128xf32>
    %34 = arith.addf %31, %33 : vector<8x128xf32>
    %c0_17 = arith.constant 0 : index
    %c0_18 = arith.constant 0 : index
    %c0_19 = arith.constant 0 : index
    %35 = vector.load %arg5[%c0_17, %c0_18, %c0_19] : memref<1x8x128xf32, #tpu.memory_space<vmem>>, vector<1x8x128xf32>
    %36 = vector.shape_cast %35 : vector<1x8x128xf32> to vector<8x128xf32>
    %37 = vector.shape_cast %34 : vector<8x128xf32> to vector<1x8x128xf32>
    tpu.vector_store %arg5[%c0_17, %c0_18, %c0_19], %37 {strides = array<i32>} : memref<1x8x128xf32, #tpu.memory_space<vmem>>, vector<1x8x128xf32>,
    return
  }
  func.func @transform_0(%arg0: i32, %arg1: i32) -> (i32, i32) {
    %c1_i32 = arith.constant 1 : i32
    %0 = arith.muli %arg0, %c1_i32 : i32
    %1 = arith.addi %0, %arg1 : i32
    %c0_i32 = arith.constant 0 : i32
    %c0_i32_0 = arith.constant 0 : i32
    return %1, %c0_i32 : i32, i32
  }
  func.func @transform_1(%arg0: i32, %arg1: i32) -> (i32, i32) {
    %c1_i32 = arith.constant 1 : i32
    %0 = arith.muli %arg0, %c1_i32 : i32
    %1 = arith.addi %0, %arg1 : i32
    %c0_i32 = arith.constant 0 : i32
    %c0_i32_0 = arith.constant 0 : i32
    return %1, %c0_i32 : i32, i32
  }
  func.func @transform_2(%arg0: i32, %arg1: i32) -> (i32, i32, i32) {
    %c0_i32 = arith.constant 0 : i32
    %c0_i32_0 = arith.constant 0 : i32
    %c0_i32_1 = arith.constant 0 : i32
    return %arg0, %c0_i32, %c0_i32_0 : i32, i32, i32
  }
  func.func @transform_3(%arg0: i32, %arg1: i32) -> (i32, i32, i32) {
    %c0_i32 = arith.constant 0 : i32
    %c0_i32_0 = arith.constant 0 : i32
    %c0_i32_1 = arith.constant 0 : i32
    return %arg0, %c0_i32, %c0_i32_0 : i32, i32, i32
  }
}

</mosaic_0001>

<llo_original>
// kernel: tpu_custom_call.1
$region0: #{tpu_custom_call.1}
  #allocation0 [shape = 'u32[]', space=smem, size = 0x4, offset = 0x4, fixed_abs, tag = 'smem constant byte address 0x4 - core index']
  #allocation1 [shape = 'u32[144,128]{1,0:T(1,128)}', space=vmem, size = 0x12000, scoped, tag = 'internal scratch']
  %s0 = inlined_call_operand.hbm [shape: f32[16,128], index: 0, kind: input, shape index: {}]
  %s1 = inlined_call_operand.hbm [shape: s32[16,128], index: 1, kind: input, shape index: {}]
  %s2 = inlined_call_operand.hbm [shape: f32[1,8,128], index: 2, kind: output, shape index: {0}]
  %s3 = inlined_call_operand.hbm [shape: f32[1,8,128], index: 3, kind: output, shape index: {1}]
  %4 = xla_tuple %s2, %s3
  %s5 = sld [smem:[#allocation0]]
  $region38: #{tpu_custom_call.1} parent=0
    _
  %s7 = ssub.s32 1, %s5
  %s8 = scalar_select 0, %s7, %s5
  $region1: #{tpu_custom_call.1} parent=0
    #allocation2 [shape = 'u8[8192]{0}', space=vmem, size = 0x2000, scoped, tag = 'input window, operand 0, single buffered']
    #allocation3 [shape = 's32[1]{0}', space=sflag, size = 0x4, scoped, tag = 'scoped memory for tpu_custom_call.1']
    #allocation4 [shape = 's32[1]{0}', space=sflag, size = 0x4, scoped, tag = 'scoped memory for tpu_custom_call.1']
    #allocation5 [shape = 'u8[8192]{0}', space=vmem, size = 0x2000, scoped, tag = 'input window, operand 1, single buffered']
    #allocation6 [shape = 's32[1]{0}', space=sflag, size = 0x4, scoped, tag = 'scoped memory for tpu_custom_call.1']
    #allocation7 [shape = 'u8[4096]{0}', space=vmem, size = 0x1000, scoped, tag = 'output window, operand 0, single buffered']
    #allocation8 [shape = 'u8[4096]{0}', space=vmem, size = 0x1000, scoped, tag = 'output window, operand 1, single buffered']
    #allocation9 [shape = 's32[1]{0}', space=sflag, size = 0x4, scoped, tag = 'scoped memory for tpu_custom_call.1']
    %9 = vsyncpa [#allocation3], 0
    %10 = vsyncpa [#allocation6], 0
    %11 = vsyncpa [#allocation4], 0
    %12 = vsyncpa [#allocation9], 0
    // Predicated region
    $region2: #{tpu_custom_call.1} parent=1 // pred_check
      _
    $region3: #{tpu_custom_call.1} parent=1 // pred_check_branch
      %14 = sbr.rel (0) target = $region5
    $region4: #{tpu_custom_call.1} parent=1 // pred_region
      %s15 = sadd.s32 0, 0
      %s16 = smul.u32 2, %s15
      %s18 = ssub.s32 256, 256
      %19 = vsyncadd [#allocation3], %s18
      %s20 = smul.addr %s16, 128
      %s21 = scalar_lea.hbm %s0, %s20
      %s22 = sshll.u32 [#allocation2], 4
      %s23 = int_to_ptr.vmem [resolvable:$true] %s22
      %28 = dma.hbm_to_vmem [thread:$0]  %s21, 256, %s23, [#allocation3], 128, 128, 8
    $region5: #{tpu_custom_call.1} parent=1 // pred_fallthru
      _
    // Predicated region
    $region6: #{tpu_custom_call.1} parent=1 // pred_check
      _
    $region7: #{tpu_custom_call.1} parent=1 // pred_check_branch
      %30 = sbr.rel (0) target = $region9
    $region8: #{tpu_custom_call.1} parent=1 // pred_region
      %s31 = sadd.s32 0, 0
      %s32 = smul.u32 2, %s31
      %s34 = ssub.s32 256, 256
      %35 = vsyncadd [#allocation6], %s34
      %s36 = smul.addr %s32, 128
      %s37 = scalar_lea.hbm %s1, %s36
      %s38 = sshll.u32 [#allocation5], 4
      %s39 = int_to_ptr.vmem [resolvable:$true] %s38
      %44 = dma.hbm_to_vmem [thread:$0]  %s37, 256, %s39, [#allocation6], 128, 128, 8
    $region9: #{tpu_custom_call.1} parent=1 // pred_fallthru
      _
    // Predicated region
    $region10: #{tpu_custom_call.1} parent=1 // pred_check
      _
    $region11: #{tpu_custom_call.1} parent=1 // pred_check_branch
      %46 = sbr.rel (0) target = $region13
    $region12: #{tpu_custom_call.1} parent=1 // pred_region
      %47 = dma.done [#allocation3], 256
    $region13: #{tpu_custom_call.1} parent=1 // pred_fallthru
      _
    // Predicated region
    $region14: #{tpu_custom_call.1} parent=1 // pred_check
      _
    $region15: #{tpu_custom_call.1} parent=1 // pred_check_branch
      %49 = sbr.rel (0) target = $region17
    $region16: #{tpu_custom_call.1} parent=1 // pred_region
      %50 = dma.done [#allocation6], 256
    $region17: #{tpu_custom_call.1} parent=1 // pred_fallthru
      _
    %s51 = sadd.s32 0, 0
    %s52 = smul.u32 2, %s51
    %s53 = sadd.s32 0, 0
    %s54 = smul.u32 2, %s53
    %p55 = scmp.eq.s32.totalorder 0, 0
    // Predicated region
    $region18: #{tpu_custom_call.1} parent=1 // pred_check
      %p56 = pneg %p55
    $region19: #{tpu_custom_call.1} parent=1 // pred_check_branch
      %58 = sbr.rel (%p56) target = $region21
    $region20: #{tpu_custom_call.1} parent=1 // pred_region
      %59 = vst [vmem:[#allocation7] sm:$0xff] 0.0
      %60 = vst [vmem:[#allocation8] sm:$0xff] 0.0
    $region21: #{tpu_custom_call.1} parent=1 // pred_fallthru
      _
    %v61 = vld [vmem:[#allocation5] sm:$0xff]
    %v62 = vld [vmem:[#allocation5 + $0x8] sm:$0xff]
    %vm63 = vcmp.ne.s32.totalorder %v61, 4294967196
    %vm64 = vcmp.ne.s32.totalorder %v62, 4294967196
    %v65 = vld [vmem:[#allocation2] sm:$0xff]
    %v66 = vld [vmem:[#allocation2 + $0x8] sm:$0xff]
    %v67 = vcvt.s32.f32 %v61
    %v68 = vcvt.s32.f32 %v62
    %v69 = vmax.f32 %v65, 0.0
    %v70 = vmax.f32 %v66, 0.0
    %v71 = vmul.f32 %v65, %v67
    %v72 = vmul.f32 %v66, %v68
    %v73 = vsub.f32 %v69, %v71
    %v74 = vsub.f32 %v70, %v72
    %v75 = vand.u32 2147483647, %v65
    %v76 = vand.u32 2147483647, %v66
    %v77 = vsub.f32 0.0, %v75
    %v78 = vsub.f32 0.0, %v76
    %v79 = vmul.f32 %v77, 1.442695
    %v80 = vpow.pop %v79
    %v81 = vmul.f32 %v78, 1.442695
    %v82 = vpow.pop %v81
    %v83 = vadd.f32 %v80, 1.0
    %v84 = vlog2.pop %v83
    %v85 = vmul.f32 %v84, 0.6931472
    %v86 = vmul.f32 -0.5, %v80
    %v87 = vadd.f32 %v86, 1.0
    %v88 = vmul.f32 %v87, %v80
    %v89 = vand.u32 2147483647, %v80
    %vm90 = vcmp.lt.f32.partialorder %v89, 0.0004427343
    %v91 = vsel %vm90, %v88, %v85
    %v92 = vadd.f32 %v82, 1.0
    %v93 = vlog2.pop %v92
    %v94 = vmul.f32 %v93, 0.6931472
    %v95 = vmul.f32 -0.5, %v82
    %v96 = vadd.f32 %v95, 1.0
    %v97 = vmul.f32 %v96, %v82
    %v98 = vand.u32 2147483647, %v82
    %vm99 = vcmp.lt.f32.partialorder %v98, 0.0004427343
    %v100 = vsel %vm99, %v97, %v94
    %v101 = vadd.f32 %v73, %v91
    %v102 = vadd.f32 %v74, %v100
    %v103 = vsel %vm63, %v101, 0.0
    %v104 = vsel %vm64, %v102, 0.0
    %v105 = vsel %vm63, 1, 0
    %v106 = vsel %vm64, 1, 0
    %v107 = vcvt.s32.f32 %v105
    %v108 = vcvt.s32.f32 %v106
    %v109 = vld [vmem:[#allocation7] sm:$0xff]
    %v110 = vadd.f32 %v103, %v104
    %v111 = vadd.f32 %v109, %v110
    %112 = vst [vmem:[#allocation7] sm:$0xff] %v111
    %v113 = vld [vmem:[#allocation8] sm:$0xff]
    %v114 = vadd.f32 %v107, %v108
    %v115 = vadd.f32 %v113, %v114
    %116 = vst [vmem:[#allocation8] sm:$0xff] %v115
    // Predicated region
    $region22: #{tpu_custom_call.1} parent=1 // pred_check
      _
    $region23: #{tpu_custom_call.1} parent=1 // pred_check_branch
      %118 = sbr.rel (0) target = $region25
    $region24: #{tpu_custom_call.1} parent=1 // pred_region
      %s120 = ssub.s32 128, 128
      %121 = vsyncadd [#allocation4], %s120
      %s123 = sshll.u32 [#allocation7], 4
      %s124 = int_to_ptr.vmem [resolvable:$true] %s123
      %126 = dma.vmem_to_hbm [thread:$0]  %s124, 128, %s2, [#allocation4]
    $region25: #{tpu_custom_call.1} parent=1 // pred_fallthru
      _
    // Predicated region
    $region26: #{tpu_custom_call.1} parent=1 // pred_check
      _
    $region27: #{tpu_custom_call.1} parent=1 // pred_check_branch
      %128 = sbr.rel (0) target = $region29
    $region28: #{tpu_custom_call.1} parent=1 // pred_region
      %s130 = ssub.s32 128, 128
      %131 = vsyncadd [#allocation9], %s130
      %s133 = sshll.u32 [#allocation8], 4
      %s134 = int_to_ptr.vmem [resolvable:$true] %s133
      %136 = dma.vmem_to_hbm [thread:$0]  %s134, 128, %s3, [#allocation9]
    $region29: #{tpu_custom_call.1} parent=1 // pred_fallthru
      _
    // Predicated region
    $region30: #{tpu_custom_call.1} parent=1 // pred_check
      _
    $region31: #{tpu_custom_call.1} parent=1 // pred_check_branch
      %138 = sbr.rel (0) target = $region33
    $region32: #{tpu_custom_call.1} parent=1 // pred_region
      %139 = dma.done [#allocation4], 128
    $region33: #{tpu_custom_call.1} parent=1 // pred_fallthru
      _
    // Predicated region
    $region34: #{tpu_custom_call.1} parent=1 // pred_check
      _
    $region35: #{tpu_custom_call.1} parent=1 // pred_check_branch
      %141 = sbr.rel (0) target = $region37
    $region36: #{tpu_custom_call.1} parent=1 // pred_region
      %142 = dma.done [#allocation9], 128
    $region37: #{tpu_custom_call.1} parent=1 // pred_fallthru
      _
    %143 = vsyncpa [#allocation3], 1
    %144 = vsyncpa [#allocation6], 1
    %145 = vsyncpa [#allocation4], 1
    %146 = vsyncpa [#allocation9], 1

</llo_original>
